<compile_context>
chip_gen: v7x
topology: tpu7x:2x2x1
jax: 0.10.0
libtpu: 0.0.40
codegen_flags: <defaults>
</compile_context>

<pallas_src>
import functools

import jax
import jax.numpy as jnp
from jax.experimental import pallas as pl
from jax.experimental.pallas import tpu as pltpu


def _round_up(x, m):
    return (x + m - 1) // m * m


def _gcln_kernel(x_ref, gamma_ref, beta_ref, o_ref, acc_ref, *, eps, count):
    # x_ref / o_ref block: (1, C_pad, TT); gamma_ref / beta_ref: (C_pad, 1)
    # acc_ref: SMEM (2,) f32 = [sum, sum_of_squares], persists across grid steps.
    p = pl.program_id(1)  # pass: 0 = accumulate, 1 = normalize
    t = pl.program_id(2)  # time tile

    @pl.when(jnp.logical_and(p == 0, t == 0))
    def _init():
        acc_ref[0] = jnp.float32(0.0)
        acc_ref[1] = jnp.float32(0.0)

    @pl.when(p == 0)
    def _accumulate():
        x = x_ref[...].astype(jnp.float32)
        acc_ref[0] = acc_ref[0] + jnp.sum(x)
        acc_ref[1] = acc_ref[1] + jnp.sum(x * x)

    @pl.when(p == 1)
    def _normalize():
        inv_n = 1.0 / count
        mean = acc_ref[0] * inv_n
        # var = E[x^2] - mean^2, accumulated in f32; clamp guards tiny negatives.
        var = jnp.maximum(acc_ref[1] * inv_n - mean * mean, 0.0)
        inv = jax.lax.rsqrt(var + eps)
        gamma = gamma_ref[...].astype(jnp.float32)        # (C_pad, 1)
        beta = beta_ref[...].astype(jnp.float32)          # (C_pad, 1)
        scale = gamma * inv                               # fused gamma * inv
        shift = beta - mean * scale
        x = x_ref[...].astype(jnp.float32)                # (1, C_pad, TT)
        o_ref[...] = (x * scale + shift).astype(o_ref.dtype)


def global_channel_layer_norm(x, gamma, beta, eps=1e-5, *,
                              time_tile_bytes=2 * 1024 * 1024):
    """x: (N, C, T); gamma, beta: (C, 1). Returns (N, C, T)."""
    N, C, T = x.shape
    itemsize = jnp.dtype(x.dtype).itemsize
    sub = max(8, 32 // itemsize)                 # sublane multiple (8 f32, 16 bf16)
    C_pad = _round_up(C, sub)

    # Time tile: multiple of 128 lanes, roughly time_tile_bytes of input per tile.
    tt_max = max(128, (time_tile_bytes // (C_pad * itemsize)) // 128 * 128)
    TT = min(tt_max, _round_up(T, 128))
    T_pad = _round_up(T, TT)
    num_t = T_pad // TT

    if C_pad != C or T_pad != T:
        x_p = jnp.pad(x, ((0, 0), (0, C_pad - C), (0, T_pad - T)))
    else:
        x_p = x
    gamma_p = gamma if C_pad == C else jnp.pad(gamma, ((0, C_pad - C), (0, 0)))
    beta_p = beta if C_pad == C else jnp.pad(beta, ((0, C_pad - C), (0, 0)))

    kernel = functools.partial(_gcln_kernel, eps=float(eps), count=float(C * T))

    out = pl.pallas_call(
        kernel,
        out_shape=jax.ShapeDtypeStruct((N, C_pad, T_pad), x.dtype),
        grid_spec=pltpu.PrefetchScalarGridSpec(
            num_scalar_prefetch=0,
            grid=(N, 2, num_t),                           # (batch, pass, time tile)
            in_specs=[
                pl.BlockSpec((1, C_pad, TT), lambda n, p, t: (n, 0, t)),
                pl.BlockSpec((C_pad, 1), lambda n, p, t: (0, 0)),
                pl.BlockSpec((C_pad, 1), lambda n, p, t: (0, 0)),
            ],
            # Pass 0 keeps the output block pinned at (n, 0, 0) => no garbage
            # writebacks; pass 1 walks and writes every lane-dense tile.
            out_specs=pl.BlockSpec((1, C_pad, TT), lambda n, p, t: (n, 0, t * p)),
            scratch_shapes=[pltpu.SMEM((2,), jnp.float32)],
        ),
        compiler_params=pltpu.CompilerParams(
            dimension_semantics=("parallel", "arbitrary", "arbitrary"),
            vmem_limit_bytes=32 * 1024 * 1024,
        ),
    )(x_p, gamma_p, beta_p)

    if C_pad != C or T_pad != T:
        out = out[:, :C, :T]
    return out


def _reference(x, gamma, beta, eps=1e-5):
    # Pure-JAX reference mirroring the PyTorch forward pass.
    mean = jnp.mean(x, axis=(1, 2), keepdims=True)
    var = jnp.mean((x - mean) ** 2, axis=(1, 2), keepdims=True)
    return gamma[None] * (x - mean) / jnp.sqrt(var + eps) + beta[None]


if __name__ == "__main__":
    key = jax.random.PRNGKey(0)
    N, C, T = 2, 4, 16                      # small shapes: batch=2, channels=4, time=16
    x = jax.random.normal(key, (N, C, T), dtype=jnp.float32)

    # Deterministic parameter init matching the module's __init__:
    # beta = zeros(dim, 1), gamma = ones(dim, 1)
    gamma = jnp.ones((C, 1), dtype=jnp.float32)
    beta = jnp.zeros((C, 1), dtype=jnp.float32)

    out = global_channel_layer_norm(x, gamma, beta, eps=1e-5)
    out = jax.block_until_ready(out)

    ref = _reference(x, gamma, beta, eps=1e-5)
    assert out.shape == (N, C, T)
    assert jnp.allclose(out, ref, atol=1e-5, rtol=1e-5), "mismatch vs reference"

    print("KERNEL_OK")
</pallas_src>

<mosaic_0001>
module attributes {stable_mosaic.version = 11 : i64} {
  func.func @_gcln_kernel(%arg0: i32, %arg1: i32, %arg2: i32, %arg3: memref<1x8x128xf32, #tpu.memory_space<vmem>>, %arg4: memref<8x1xf32, #tpu.memory_space<vmem>>, %arg5: memref<8x1xf32, #tpu.memory_space<vmem>>, %arg6: memref<1x8x128xf32, #tpu.memory_space<vmem>>, %arg7: memref<2xf32, #tpu.memory_space<smem>>) attributes {dimension_semantics = [#tpu.dimension_semantics<parallel>, #tpu.dimension_semantics<arbitrary>, #tpu.dimension_semantics<arbitrary>], iteration_bounds = array<i64: 2, 2, 1>, scalar_prefetch = 0 : i64, scratch_operands = 1 : i64, tpu.core_type = #tpu.core_type<tc>, window_params = [{transform_indices = @transform_0, window_bounds = array<i64: 1, 8, 128>}, {pipeline_mode = #tpu.pipeline_mode<synchronous>, transform_indices = @transform_1, window_bounds = array<i64: 8, 1>}, {pipeline_mode = #tpu.pipeline_mode<synchronous>, transform_indices = @transform_2, window_bounds = array<i64: 8, 1>}, {transform_indices = @transform_3, window_bounds = array<i64: 1, 8, 128>}]} {
    %c0_i32 = arith.constant 0 : i32
    %0 = arith.cmpi eq, %arg1, %c0_i32 : i32
    %c0_i32_0 = arith.constant 0 : i32
    %1 = arith.cmpi eq, %arg2, %c0_i32_0 : i32
    %2 = arith.andi %0, %1 : i1
    %3 = arith.extui %2 : i1 to i32
    %c0_i32_1 = arith.constant 0 : i32
    %4 = arith.cmpi ne, %3, %c0_i32_1 : i32
    scf.if %4 {
      %cst = arith.constant 0.000000e+00 : f32
      %c0 = arith.constant 0 : index
      %11 = memref.load %arg7[%c0] : memref<2xf32, #tpu.memory_space<smem>>
      memref.store %cst, %arg7[%c0] : memref<2xf32, #tpu.memory_space<smem>>
      %cst_5 = arith.constant 0.000000e+00 : f32
      %c1 = arith.constant 1 : index
      %12 = memref.load %arg7[%c1] : memref<2xf32, #tpu.memory_space<smem>>
      memref.store %cst_5, %arg7[%c1] : memref<2xf32, #tpu.memory_space<smem>>
    } else {
    }
    %c0_i32_2 = arith.constant 0 : i32
    %5 = arith.cmpi eq, %arg1, %c0_i32_2 : i32
    %6 = arith.extui %5 : i1 to i32
    %c0_i32_3 = arith.constant 0 : i32
    %7 = arith.cmpi ne, %6, %c0_i32_3 : i32
    scf.if %7 {
      %c0 = arith.constant 0 : index
      %c0_5 = arith.constant 0 : index
      %c0_6 = arith.constant 0 : index
      %11 = vector.load %arg3[%c0, %c0_5, %c0_6] : memref<1x8x128xf32, #tpu.memory_space<vmem>>, vector<1x8x128xf32>
      %c0_7 = arith.constant 0 : index
      %12 = memref.load %arg7[%c0_7] : memref<2xf32, #tpu.memory_space<smem>>
      %13 = vector.shape_cast %11 : vector<1x8x128xf32> to vector<1x1x8x128xf32>
      %cst = arith.constant dense<0.000000e+00> : vector<1xf32>
      %14 = vector.multi_reduction <add>, %13, %cst [1, 2, 3] : vector<1x1x8x128xf32> to vector<1xf32>
      %15 = vector.shape_cast %14 : vector<1xf32> to vector<1x1x1x1xf32>
      %16 = vector.extract %15[0, 0, 0, 0] : f32 from vector<1x1x1x1xf32>
      %17 = arith.addf %12, %16 : f32
      %c0_8 = arith.constant 0 : index
      %18 = memref.load %arg7[%c0_8] : memref<2xf32, #tpu.memory_space<smem>>
      memref.store %17, %arg7[%c0_8] : memref<2xf32, #tpu.memory_space<smem>>
      %c1 = arith.constant 1 : index
      %19 = memref.load %arg7[%c1] : memref<2xf32, #tpu.memory_space<smem>>
      %20 = arith.mulf %11, %11 : vector<1x8x128xf32>
      %21 = vector.shape_cast %20 : vector<1x8x128xf32> to vector<1x1x8x128xf32>
      %cst_9 = arith.constant dense<0.000000e+00> : vector<1xf32>
      %22 = vector.multi_reduction <add>, %21, %cst_9 [1, 2, 3] : vector<1x1x8x128xf32> to vector<1xf32>
      %23 = vector.shape_cast %22 : vector<1xf32> to vector<1x1x1x1xf32>
      %24 = vector.extract %23[0, 0, 0, 0] : f32 from vector<1x1x1x1xf32>
      %25 = arith.addf %19, %24 : f32
      %c1_10 = arith.constant 1 : index
      %26 = memref.load %arg7[%c1_10] : memref<2xf32, #tpu.memory_space<smem>>
      memref.store %25, %arg7[%c1_10] : memref<2xf32, #tpu.memory_space<smem>>
    } else {
    }
    %c1_i32 = arith.constant 1 : i32
    %8 = arith.cmpi eq, %arg1, %c1_i32 : i32
    %9 = arith.extui %8 : i1 to i32
    %c0_i32_4 = arith.constant 0 : i32
    %10 = arith.cmpi ne, %9, %c0_i32_4 : i32
    scf.if %10 {
      %c0 = arith.constant 0 : index
      %11 = memref.load %arg7[%c0] : memref<2xf32, #tpu.memory_space<smem>>
      %cst = arith.constant 1.562500e-02 : f32
      %12 = arith.mulf %11, %cst : f32
      %c1 = arith.constant 1 : index
      %13 = memref.load %arg7[%c1] : memref<2xf32, #tpu.memory_space<smem>>
      %cst_5 = arith.constant 1.562500e-02 : f32
      %14 = arith.mulf %13, %cst_5 : f32
      %15 = arith.mulf %12, %12 : f32
      %16 = arith.subf %14, %15 : f32
      %cst_6 = arith.constant 0.000000e+00 : f32
      %17 = arith.maximumf %16, %cst_6 : f32
      %cst_7 = arith.constant 9.99999974E-6 : f32
      %18 = arith.addf %17, %cst_7 : f32
      %19 = math.rsqrt %18 : f32
      %c0_8 = arith.constant 0 : index
      %c0_9 = arith.constant 0 : index
      %20 = vector.load %arg4[%c0_8, %c0_9] : memref<8x1xf32, #tpu.memory_space<vmem>>, vector<8x1xf32>
      %c0_10 = arith.constant 0 : index
      %c0_11 = arith.constant 0 : index
      %21 = vector.load %arg5[%c0_10, %c0_11] : memref<8x1xf32, #tpu.memory_space<vmem>>, vector<8x1xf32>
      %22 = vector.broadcast %19 : f32 to vector<8x1xf32>
      %23 = arith.mulf %20, %22 : vector<8x1xf32>
      %24 = vector.broadcast %12 : f32 to vector<8x1xf32>
      %25 = arith.mulf %24, %23 : vector<8x1xf32>
      %26 = arith.subf %21, %25 : vector<8x1xf32>
      %c0_12 = arith.constant 0 : index
      %c0_13 = arith.constant 0 : index
      %c0_14 = arith.constant 0 : index
      %27 = vector.load %arg3[%c0_12, %c0_13, %c0_14] : memref<1x8x128xf32, #tpu.memory_space<vmem>>, vector<1x8x128xf32>
      %28 = vector.shape_cast %23 : vector<8x1xf32> to vector<1x8x1xf32>
      %29 = vector.broadcast %28 : vector<1x8x1xf32> to vector<1x8x128xf32>
      %30 = arith.mulf %27, %29 : vector<1x8x128xf32>
      %31 = vector.shape_cast %26 : vector<8x1xf32> to vector<1x8x1xf32>
      %32 = vector.broadcast %31 : vector<1x8x1xf32> to vector<1x8x128xf32>
      %33 = arith.addf %30, %32 : vector<1x8x128xf32>
      %c0_15 = arith.constant 0 : index
      %c0_16 = arith.constant 0 : index
      %c0_17 = arith.constant 0 : index
      %34 = vector.load %arg6[%c0_15, %c0_16, %c0_17] : memref<1x8x128xf32, #tpu.memory_space<vmem>>, vector<1x8x128xf32>
      tpu.vector_store %arg6[%c0_15, %c0_16, %c0_17], %33 {strides = array<i32>} : memref<1x8x128xf32, #tpu.memory_space<vmem>>, vector<1x8x128xf32>,
    } else {
    }
    return
  }
  func.func @transform_0(%arg0: i32, %arg1: i32, %arg2: i32) -> (i32, i32, i32) {
    %c0_i32 = arith.constant 0 : i32
    %c0_i32_0 = arith.constant 0 : i32
    return %arg0, %c0_i32, %arg2 : i32, i32, i32
  }
  func.func @transform_1(%arg0: i32, %arg1: i32, %arg2: i32) -> (i32, i32) {
    %c0_i32 = arith.constant 0 : i32
    %c0_i32_0 = arith.constant 0 : i32
    %c0_i32_1 = arith.constant 0 : i32
    return %c0_i32, %c0_i32_0 : i32, i32
  }
  func.func @transform_2(%arg0: i32, %arg1: i32, %arg2: i32) -> (i32, i32) {
    %c0_i32 = arith.constant 0 : i32
    %c0_i32_0 = arith.constant 0 : i32
    %c0_i32_1 = arith.constant 0 : i32
    return %c0_i32, %c0_i32_0 : i32, i32
  }
  func.func @transform_3(%arg0: i32, %arg1: i32, %arg2: i32) -> (i32, i32, i32) {
    %0 = arith.muli %arg2, %arg1 : i32
    %c0_i32 = arith.constant 0 : i32
    %c0_i32_0 = arith.constant 0 : i32
    return %arg0, %c0_i32, %0 : i32, i32, i32
  }
}

</mosaic_0001>

<llo_original>
// kernel: tpu_custom_call.1
$region0: #{tpu_custom_call.1}
  #allocation0 [shape = 'u32[]', space=smem, size = 0x4, offset = 0x4, fixed_abs, tag = 'smem constant byte address 0x4 - core index']
  #allocation1 [shape = 'u32[144,128]{1,0:T(1,128)}', space=vmem, size = 0x12000, scoped, tag = 'internal scratch']
  #allocation2 [shape = 'f32[2]{0:T(128)}', space=smem, size = 0x200, scoped, tag = 'scratch operand']
  %s0 = inlined_call_operand.vmem [shape: f32[2,8,128], index: 0, kind: input, shape index: {}]
  %s1 = inlined_call_operand.vmem [shape: f32[8,1], index: 1, kind: input, shape index: {}]
  %s2 = inlined_call_operand.vmem [shape: f32[8,1], index: 2, kind: input, shape index: {}]
  %s3 = inlined_call_operand.hbm [shape: f32[2,8,128], index: 3, kind: output, shape index: {}]
  %s4 = sld [smem:[#allocation0]]
  $region57: #{tpu_custom_call.1} parent=0
    _
  %s6 = ssub.s32 1, %s4
  %s7 = scalar_select 0, %s6, %s4
  $region1: #{tpu_custom_call.1} parent=0
    #allocation3 [shape = 'u8[8192]{0}', space=vmem, size = 0x2000, scoped, tag = 'output window, operand 0']
    #allocation4 [shape = 's32[2]{0}', space=sflag, size = 0x8, scoped, tag = 'scoped memory for tpu_custom_call.1']
    %8 = vsyncpa [#allocation4], 0
    %s9 = scalar_lea.sflag [#allocation4], 1
    %10 = vsyncpa %s9, 0
    loop: start=0, step=1, limit=6
    $region2: #{tpu_custom_call.1} parent=1 // loop_pre_header
      _
    $region3: #{tpu_custom_call.1} parent=1 // loop_header
      %s12 = sphi 0, %s16
      %p13 = scmp.ge.s32.totalorder %s12, 6
      %s19 = sphi 0, %s38
      %s20 = sphi 0, %s34
      %s21 = sphi 0, %s30
      %s22 = sphi 0, %s19
      %s23 = sphi 0, %s20
      %s24 = sphi 0, %s21
      %s25 = sphi 0, %s22
      %s26 = sphi 0, %s23
      %s27 = sphi 0, %s24
      %s43 = sphi 0, %s45
      %s46 = sphi 0, %s43
      %s47 = sphi 0, %s46
      %s63 = sphi 0, %s47
      %s67 = sphi 0, %s67
      %s69 = sphi 0, %s67
      %s70 = sphi 0, %s69
      %s84 = sphi 0, %s70
      %s88 = sphi 0, %s88
      %s90 = sphi 0, %s88
      %s91 = sphi 0, %s90
      %s105 = sphi 0, %s91
      %s115 = sphi 0, %s117
      %s118 = sphi 0, %s115
      %s119 = sphi 0, %s118
      %s135 = sphi 0, %s119
    $region4: #{tpu_custom_call.1} parent=1 // loop_header_branch
      %15 = sbr.rel (%p13) target = $region8
    $region5: #{tpu_custom_call.1} parent=1 // loop_body
      %s17 = ssub.s32 %s12, 1
      %s18 = ssub.s32 %s12, 2
      %s28 = sadd.s32 1, %s21
      %p29 = scmp.ge.s32.totalorder %s28, 1
      %s30 = scalar_select %p29, 0, %s28
      %s31 = sadd.s32 1, %s20
      %s32 = scalar_select %p29, %s31, %s20
      %p33 = scmp.ge.s32.totalorder %s32, 2
      %s34 = scalar_select %p33, 0, %s32
      %s35 = sadd.s32 1, %s19
      %s36 = scalar_select %p33, %s35, %s19
      %p37 = scmp.ge.s32.totalorder %s36, 2
      %s38 = scalar_select %p37, 0, %s36
      %s39 = ssub.s32 %s19, %s38
      %s40 = ssub.s32 %s21, %s30
      %s41 = sor.u32 %s39, %s40
      %p42 = scmp.eq.s32.totalorder %s41, 0
      %s44 = sadd.s32 %s43, 1
      %s45 = scalar_select %p42, %s43, %s44
      %p48 = pneg %p42
      %p49 = scmp.eq.s32.totalorder %s12, 3
      %p50 = por %p48, %p49
      %p51 = scmp.ne.s32.totalorder %s43, %s46
      %p52 = scmp.eq.s32.totalorder %s12, 0
      %p53 = por %p51, %p52
      %p54 = scmp.ne.s32.totalorder %s43, %s46
      %p55 = scmp.eq.s32.totalorder %s17, 3
      %p56 = por %p54, %p55
      %p57 = scmp.ne.s32.totalorder %s46, %s47
      %p58 = scmp.eq.s32.totalorder %s17, 0
      %p59 = por %p57, %p58
      %p60 = scmp.ne.s32.totalorder %s46, %s47
      %p61 = scmp.eq.s32.totalorder %s18, 3
      %p62 = por %p60, %p61
      %p64 = scmp.ne.s32.totalorder %s47, %s63
      %p65 = scmp.eq.s32.totalorder %s18, 0
      %p66 = por %p64, %p65
      %s68 = sadd.s32 %s67, 1
      %p71 = scmp.eq.s32.totalorder %s12, 3
      %p72 = scmp.ne.s32.totalorder %s67, %s69
      %p73 = scmp.eq.s32.totalorder %s12, 0
      %p74 = por %p72, %p73
      %p75 = scmp.ne.s32.totalorder %s67, %s69
      %p76 = scmp.eq.s32.totalorder %s17, 3
      %p77 = por %p75, %p76
      %p78 = scmp.ne.s32.totalorder %s69, %s70
      %p79 = scmp.eq.s32.totalorder %s17, 0
      %p80 = por %p78, %p79
      %p81 = scmp.ne.s32.totalorder %s69, %s70
      %p82 = scmp.eq.s32.totalorder %s18, 3
      %p83 = por %p81, %p82
      %p85 = scmp.ne.s32.totalorder %s70, %s84
      %p86 = scmp.eq.s32.totalorder %s18, 0
      %p87 = por %p85, %p86
      %s89 = sadd.s32 %s88, 1
      %p92 = scmp.eq.s32.totalorder %s12, 3
      %p93 = scmp.ne.s32.totalorder %s88, %s90
      %p94 = scmp.eq.s32.totalorder %s12, 0
      %p95 = por %p93, %p94
      %p96 = scmp.ne.s32.totalorder %s88, %s90
      %p97 = scmp.eq.s32.totalorder %s17, 3
      %p98 = por %p96, %p97
      %p99 = scmp.ne.s32.totalorder %s90, %s91
      %p100 = scmp.eq.s32.totalorder %s17, 0
      %p101 = por %p99, %p100
      %p102 = scmp.ne.s32.totalorder %s90, %s91
      %p103 = scmp.eq.s32.totalorder %s18, 3
      %p104 = por %p102, %p103
      %p106 = scmp.ne.s32.totalorder %s91, %s105
      %p107 = scmp.eq.s32.totalorder %s18, 0
      %p108 = por %p106, %p107
      %s109 = smul.u32 %s21, %s20
      %s110 = smul.u32 %s30, %s34
      %s111 = ssub.s32 %s19, %s38
      %s112 = ssub.s32 %s109, %s110
      %s113 = sor.u32 %s111, %s112
      %p114 = scmp.eq.s32.totalorder %s113, 0
      %s116 = sadd.s32 %s115, 1
      %s117 = scalar_select %p114, %s115, %s116
      %p120 = pneg %p114
      %p121 = scmp.eq.s32.totalorder %s12, 3
      %p122 = por %p120, %p121
      %p123 = scmp.ne.s32.totalorder %s115, %s118
      %p124 = scmp.eq.s32.totalorder %s12, 0
      %p125 = por %p123, %p124
      %p126 = scmp.ne.s32.totalorder %s115, %s118
      %p127 = scmp.eq.s32.totalorder %s17, 3
      %p128 = por %p126, %p127
      %p129 = scmp.ne.s32.totalorder %s118, %s119
      %p130 = scmp.eq.s32.totalorder %s17, 0
      %p131 = por %p129, %p130
      %p132 = scmp.ne.s32.totalorder %s118, %s119
      %p133 = scmp.eq.s32.totalorder %s18, 3
      %p134 = por %p132, %p133
      %p136 = scmp.ne.s32.totalorder %s119, %s135
      %p137 = scmp.eq.s32.totalorder %s18, 0
      %p138 = por %p136, %p137
      %p139 = scmp.le.s32.totalorder 1, %s12
      %p140 = scmp.lt.s32.totalorder %s12, 5
      %p141 = pnand %p139, %p140
      %p142 = pneg %p141
      // Predicated region
      $region9: #{tpu_custom_call.1} parent=5 // pred_check
        _
      $region10: #{tpu_custom_call.1} parent=5 // pred_check_branch
        %144 = sbr.rel (%p141) target = $region12
      $region11: #{tpu_custom_call.1} parent=5 // pred_region
        %s145 = ssub.s32 %s12, 1
        // Predicated region
        $region13: #{tpu_custom_call.1} parent=11 // pred_check
          %p146 = pneg %p80
        $region14: #{tpu_custom_call.1} parent=11 // pred_check_branch
          %148 = sbr.rel (%p146) target = $region16
        $region15: #{tpu_custom_call.1} parent=11 // pred_region
          _
        $region16: #{tpu_custom_call.1} parent=11 // pred_fallthru
          _
        // Predicated region
        $region17: #{tpu_custom_call.1} parent=11 // pred_check
          %p149 = pneg %p101
        $region18: #{tpu_custom_call.1} parent=11 // pred_check_branch
          %151 = sbr.rel (%p149) target = $region20
        $region19: #{tpu_custom_call.1} parent=11 // pred_region
          _
        $region20: #{tpu_custom_call.1} parent=11 // pred_fallthru
          _
      $region12: #{tpu_custom_call.1} parent=5 // pred_fallthru
        _
      %p152 = scmp.lt.s32.totalorder %s12, 4
      // Predicated region
      $region21: #{tpu_custom_call.1} parent=5 // pred_check
        %p153 = pneg %p152
      $region22: #{tpu_custom_call.1} parent=5 // pred_check_branch
        %155 = sbr.rel (%p153) target = $region24
      $region23: #{tpu_custom_call.1} parent=5 // pred_region
        // Predicated region
        $region25: #{tpu_custom_call.1} parent=23 // pred_check
          %p156 = pneg %p53
        $region26: #{tpu_custom_call.1} parent=23 // pred_check_branch
          %158 = sbr.rel (%p156) target = $region28
        $region27: #{tpu_custom_call.1} parent=23 // pred_region
          %p159 = scmp.lt.s32.totalorder %s19, 1
          %s160 = scalar_select %p159, %s19, 1
          %p161 = scmp.lt.s32.totalorder %s21, 0
          %s162 = scalar_select %p161, %s21, 0
          %s163 = sadd.s32 %s162, %s160
          %s164 = smul.addr %s163, 8
          %s165 = scalar_lea.vmem %s0, %s164
        $region28: #{tpu_custom_call.1} parent=23 // pred_fallthru
          _
      $region24: #{tpu_custom_call.1} parent=5 // pred_fallthru
        _
      %p166 = scmp.le.s32.totalorder 1, %s12
      %p167 = scmp.lt.s32.totalorder %s12, 5
      %p168 = pnand %p166, %p167
      %p169 = pneg %p168
      // Predicated region
      $region29: #{tpu_custom_call.1} parent=5 // pred_check
        _
      $region30: #{tpu_custom_call.1} parent=5 // pred_check_branch
        %171 = sbr.rel (%p168) target = $region32
      $region31: #{tpu_custom_call.1} parent=5 // pred_region
        %s172 = ssub.s32 %s12, 1
        %p173 = scmp.lt.s32.totalorder %s22, 1
        %s174 = scalar_select %p173, %s22, 1
        %p175 = scmp.lt.s32.totalorder %s24, 0
        %s176 = scalar_select %p175, %s24, 0
        %s177 = sadd.s32 %s176, %s174
        %s178 = smul.addr %s177, 8
        %s179 = scalar_lea.vmem %s0, %s178
        %p180 = pneg %p59
        %p181 = pneg %p56
        %p182 = pneg %p80
        %p183 = pneg %p77
        %p184 = pneg %p101
        %p185 = pneg %p98
        %p186 = pneg %p131
        %p187 = pneg %p128
        %s188 = sand.u32 %s118, 1
        %s189 = scalar_lea.sflag [#allocation4], %s188
        %s190 = sand.u32 %s118, 1
        %s191 = smul.addr %s190, 8
        %s192 = scalar_lea.vmem [#allocation3], %s191
        %p193 = scmp.lt.s32.totalorder %s22, 1
        %s194 = scalar_select %p193, %s22, 1
        %p195 = scmp.lt.s32.totalorder %s24, 0
        %s196 = scalar_select %p195, %s24, 0
        %s197 = sadd.s32 %s196, %s194
        %s198 = smul.addr %s197, 8
        %s199 = scalar_lea.vmem %s0, %s198
        %s200 = smul.u32 %s24, %s23
        %p201 = scmp.eq.s32.totalorder %s23, 0
        %p202 = scmp.eq.s32.totalorder %s24, 0
        %p203 = pnand %p201, %p202
        %p204 = pneg %p203
        // Predicated region
        $region33: #{tpu_custom_call.1} parent=31 // pred_check
          _
        $region34: #{tpu_custom_call.1} parent=31 // pred_check_branch
          %206 = sbr.rel (%p203) target = $region36
        $region35: #{tpu_custom_call.1} parent=31 // pred_region
          %s207 = scalar_lea.smem [#allocation2], 0
          %208 = sst [smem:[%s207]] 0.0
          %s209 = scalar_lea.smem [#allocation2], 1
          %210 = sst [smem:[%s209]] 0.0
        $region36: #{tpu_custom_call.1} parent=31 // pred_fallthru
          _
        // Predicated region
        $region37: #{tpu_custom_call.1} parent=31 // pred_check
          %p211 = pneg %p201
        $region38: #{tpu_custom_call.1} parent=31 // pred_check_branch
          %213 = sbr.rel (%p211) target = $region40
        $region39: #{tpu_custom_call.1} parent=31 // pred_region
          %v214 = vld [vmem:[%s199] sm:$0xff]
          %s215 = sld [smem:[#allocation2]]
          %216 = vadd.xlane.f32.xlu0 %v214
          %v217 = vpop.xlane.xlu0 %216
          %v218 = vrot.slane %v217, 4
          %v219 = vadd.f32 %v217, %v218
          %v220 = vrot.slane %v219, 2
          %v221 = vadd.f32 %v219, %v220
          %v222 = vrot.slane %v221, 1
          %v223 = vadd.f32 %v221, %v222
          %s224 = vtos %v223
          %s225 = sadd.f32 %s215, %s224
          %s226 = scalar_lea.smem [#allocation2], 0
          %227 = sst [smem:[%s226]] %s225
          %s228 = sld [smem:[#allocation2 + $0x1]]
          %v229 = vmul.f32 %v214, %v214
          %230 = vadd.xlane.f32.xlu0 %v229
          %v231 = vpop.xlane.xlu0 %230
          %v232 = vrot.slane %v231, 4
          %v233 = vadd.f32 %v231, %v232
          %v234 = vrot.slane %v233, 2
          %v235 = vadd.f32 %v233, %v234
          %v236 = vrot.slane %v235, 1
          %v237 = vadd.f32 %v235, %v236
          %s238 = vtos %v237
          %s239 = sadd.f32 %s228, %s238
          %s240 = scalar_lea.smem [#allocation2], 1
          %241 = sst [smem:[%s240]] %s239
        $region40: #{tpu_custom_call.1} parent=31 // pred_fallthru
          _
        %p242 = scmp.eq.s32.totalorder %s23, 1
        // Predicated region
        $region41: #{tpu_custom_call.1} parent=31 // pred_check
          %p243 = pneg %p242
        $region42: #{tpu_custom_call.1} parent=31 // pred_check_branch
          %245 = sbr.rel (%p243) target = $region44
        $region43: #{tpu_custom_call.1} parent=31 // pred_region
          %s246 = sld [smem:[#allocation2]]
          %s247 = smul.f32 %s246, 0.015625
          %s248 = sld [smem:[#allocation2 + $0x1]]
          %s249 = smul.f32 %s248, 0.015625
          %s250 = smul.f32 %s247, %s247
          %s251 = ssub.f32 %s249, %s250
          %s252 = smax.f32 %s251, 0.0
          %s253 = sadd.f32 %s252, 1e-05
          %v254 = vstv %s253
          %v255 = vrsqrt.pop %v254
          %s256 = vtos %v255
          %v257 = vld [vmem:[%s1] sm:$0xff]
          %v258 = vld [vmem:[%s2] sm:$0xff]
          %v259 = vstv %s256
          %v260 = vmul.f32 %v257, %v259
          %v261 = vstv %s247
          %v262 = vmul.f32 %v261, %v260
          %v263 = vsub.f32 %v258, %v262
          %v264 = vld [vmem:[%s199] sm:$0xff]
          %266 = vset.pattern.permute.xlu0 0
          %267 = vperm.xlu0 %266, %v260
          %v268 = vpop.permute.xlu0 %267
          %v270 = vmul.f32 %v264, %v268
          %272 = vset.pattern.permute.xlu0 0
          %273 = vperm.xlu0 %272, %v263
          %v274 = vpop.permute.xlu0 %273
          %v276 = vadd.f32 %v270, %v274
          %277 = vst [vmem:[%s192] sm:$0xff] %v276
        $region44: #{tpu_custom_call.1} parent=31 // pred_fallthru
          _
        %s278 = sand.u32 %s118, 1
        %s279 = scalar_lea.sflag [#allocation4], %s278
        %s280 = sand.u32 %s118, 1
        %s281 = smul.addr %s280, 8
        %s282 = scalar_lea.vmem [#allocation3], %s281
        // Predicated region
        $region45: #{tpu_custom_call.1} parent=31 // pred_check
          %p283 = pneg %p128
        $region46: #{tpu_custom_call.1} parent=31 // pred_check_branch
          %285 = sbr.rel (%p283) target = $region48
        $region47: #{tpu_custom_call.1} parent=31 // pred_region
          %s286 = smul.u32 %s24, %s23
          %s288 = ssub.s32 128, 128
          %289 = vsyncadd %s279, %s288
          %s290 = sadd.s32 %s286, %s22
          %s291 = smul.addr %s290, 128
          %s292 = scalar_lea.hbm %s3, %s291
          %s294 = sshll.u32 %s282, 4
          %s295 = int_to_ptr.vmem [resolvable:$true] %s294
          %297 = dma.vmem_to_hbm [thread:$0]  %s295, 128, %s292, %s279
        $region48: #{tpu_custom_call.1} parent=31 // pred_fallthru
          _
      $region32: #{tpu_custom_call.1} parent=5 // pred_fallthru
        _
      %p298 = scmp.le.s32.totalorder 2, %s12
      // Predicated region
      $region49: #{tpu_custom_call.1} parent=5 // pred_check
        %p299 = pneg %p298
      $region50: #{tpu_custom_call.1} parent=5 // pred_check_branch
        %301 = sbr.rel (%p299) target = $region52
      $region51: #{tpu_custom_call.1} parent=5 // pred_region
        %s302 = ssub.s32 %s12, 2
        // Predicated region
        $region53: #{tpu_custom_call.1} parent=51 // pred_check
          %p303 = pneg %p134
        $region54: #{tpu_custom_call.1} parent=51 // pred_check_branch
          %305 = sbr.rel (%p303) target = $region56
        $region55: #{tpu_custom_call.1} parent=51 // pred_region
          %s306 = sand.u32 %s119, 1
          %s307 = scalar_lea.sflag [#allocation4], %s306
          %s308 = sand.u32 %s119, 1
          %s309 = smul.addr %s308, 8
          %s310 = scalar_lea.vmem [#allocation3], %s309
          %311 = dma.done %s307, 128
        $region56: #{tpu_custom_call.1} parent=51 // pred_fallthru
          _
      $region52: #{tpu_custom_call.1} parent=5 // pred_fallthru
        _
    $region6: #{tpu_custom_call.1} parent=1 // loop_footer
      %s16 = sadd.s32 1, %s12
    $region7: #{tpu_custom_call.1} parent=1 // loop_footer_branch
      %11 = sbr.rel target = $region3
    $region8: #{tpu_custom_call.1} parent=1 // loop_exit
      _
    %312 = vsyncpa [#allocation4], 1
    %s313 = scalar_lea.sflag [#allocation4], 1
    %314 = vsyncpa %s313, 1

</llo_original>
